<compile_context>
chip_gen: v7x
topology: tpu7x:2x2x1
jax: 0.10.0
libtpu: 0.0.40
codegen_flags: <defaults>
</compile_context>

<pallas_src>
import functools

import jax
import jax.numpy as jnp
from jax.experimental import pallas as pl
from jax.experimental.pallas import tpu as pltpu

_LANE = 128


def _round_up(n, m):
    return (n + m - 1) // m * m


def _mlp_kernel(x_ref, w1_ref, b1_ref, w2_ref, b2_ref, w3_ref, b3_ref, o_ref):
    # Layer 1: (TM, Fin) @ (Fin, H1) -> f32 acc, bias + sigmoid in f32.
    h1 = jnp.dot(x_ref[...], w1_ref[...], preferred_element_type=jnp.float32)
    h1 = jax.nn.sigmoid(h1 + b1_ref[...])
    # Layer 2: (TM, H1) @ (H1, H2)
    h2 = jnp.dot(h1.astype(w2_ref.dtype), w2_ref[...],
                 preferred_element_type=jnp.float32)
    h2 = jax.nn.sigmoid(h2 + b2_ref[...])
    # Output layer: (TM, H2) @ (H2, Out)
    y = jnp.dot(h2.astype(w3_ref.dtype), w3_ref[...],
                preferred_element_type=jnp.float32)
    y = jax.nn.sigmoid(y + b3_ref[...])
    o_ref[...] = y.astype(o_ref.dtype)


@functools.partial(jax.jit, static_argnames=("compute_dtype", "tm"))
def mlp_forward(x, w1, b1, w2, b2, w3, b3, *,
                compute_dtype=jnp.float32, tm=None):
    """Fused 3-layer MLP forward.

    x: (B, input_size) f32.
    Weights are pre-transposed to (fan_in, fan_out); biases are (1, fan_out),
    so the kernel computes sigmoid(x @ W + b), matching nn.Linear semantics.
    """
    B, f_in = x.shape
    out_size = w3.shape[1]

    # --- lane-friendly padded sizes -------------------------------------
    f_in_p = _round_up(f_in, _LANE)
    h1_p = _round_up(w1.shape[1], _LANE)
    h2_p = _round_up(w2.shape[1], _LANE)
    out_p = _round_up(out_size, _LANE)

    # --- batch tile: 256 rows for large batches, else round B up to 8 ----
    if tm is None:
        tm = 256 if B >= 256 else _round_up(B, 8)
    b_p = _round_up(B, tm)
    grid = (b_p // tm,)

    def pad2(a, rows, cols, dtype):
        return jnp.pad(a, ((0, rows - a.shape[0]),
                           (0, cols - a.shape[1]))).astype(dtype)

    x_p = pad2(x, b_p, f_in_p, compute_dtype)
    w1_p = pad2(w1, f_in_p, h1_p, compute_dtype)
    w2_p = pad2(w2, h1_p, h2_p, compute_dtype)
    w3_p = pad2(w3, h2_p, out_p, compute_dtype)
    # Biases + elementwise stay f32 (v5e has no bf16 VPU/EUP path).
    b1_p = pad2(b1, 1, h1_p, jnp.float32)
    b2_p = pad2(b2, 1, h2_p, jnp.float32)
    b3_p = pad2(b3, 1, out_p, jnp.float32)

    def resident(shape):
        # Weights / biases: same block for every grid step -> VMEM-resident.
        return pl.BlockSpec(shape, lambda i: (0, 0))

    itemsize = jnp.dtype(compute_dtype).itemsize
    flops = 2 * b_p * (f_in_p * h1_p + h1_p * h2_p + h2_p * out_p)
    transcendentals = b_p * (h1_p + h2_p + out_p)
    bytes_accessed = (b_p * f_in_p * itemsize
                      + (f_in_p * h1_p + h1_p * h2_p + h2_p * out_p) * itemsize
                      + (h1_p + h2_p + out_p) * 4
                      + b_p * out_p * 4)

    out_padded = pl.pallas_call(
        _mlp_kernel,
        out_shape=jax.ShapeDtypeStruct((b_p, out_p), jnp.float32),
        grid=grid,
        in_specs=[
            pl.BlockSpec((tm, f_in_p), lambda i: (i, 0)),   # x: tiled on batch
            resident((f_in_p, h1_p)), resident((1, h1_p)),
            resident((h1_p, h2_p)), resident((1, h2_p)),
            resident((h2_p, out_p)), resident((1, out_p)),
        ],
        out_specs=pl.BlockSpec((tm, out_p), lambda i: (i, 0)),  # lane-dense out
        compiler_params=pltpu.CompilerParams(
            dimension_semantics=("parallel",)),
        cost_estimate=pl.CostEstimate(
            flops=flops,
            transcendentals=transcendentals,
            bytes_accessed=bytes_accessed),
    )(x_p, w1_p, b1_p, w2_p, b2_p, w3_p, b3_p)

    return out_padded[:B, :out_size]


def init_params(key, input_size=3, hidden1_size=4, hidden2_size=8, output_size=1):
    """Deterministic init mimicking PyTorch nn.Linear's U(-1/sqrt(fan_in), ...)."""
    ks = jax.random.split(key, 6)

    def linear(kw, kb, fan_in, fan_out):
        bound = 1.0 / jnp.sqrt(float(fan_in))
        # stored as (fan_in, fan_out) == W.T so kernel does x @ W + b
        w = jax.random.uniform(kw, (fan_in, fan_out), jnp.float32, -bound, bound)
        b = jax.random.uniform(kb, (1, fan_out), jnp.float32, -bound, bound)
        return w, b

    w1, b1 = linear(ks[0], ks[1], input_size, hidden1_size)
    w2, b2 = linear(ks[2], ks[3], hidden1_size, hidden2_size)
    w3, b3 = linear(ks[4], ks[5], hidden2_size, output_size)
    return w1, b1, w2, b2, w3, b3


def _reference(x, params):
    w1, b1, w2, b2, w3, b3 = params
    h = jax.nn.sigmoid(x @ w1 + b1)
    h = jax.nn.sigmoid(h @ w2 + b2)
    return jax.nn.sigmoid(h @ w3 + b3)


if __name__ == "__main__":
    key = jax.random.PRNGKey(0)
    k_x, k_x2, k_p = jax.random.split(key, 3)

    input_size, h1, h2, out_size = 3, 4, 8, 1
    params = init_params(k_p, input_size, h1, h2, out_size)

    # --- small batch (module's toy size), f32 MXU path -------------------
    B = 8
    x = jax.random.normal(k_x, (B, input_size), jnp.float32)
    out = jax.block_until_ready(mlp_forward(x, *params))
    ref = _reference(x, params)
    assert out.shape == (B, out_size)
    assert jnp.allclose(out, ref, atol=1e-5, rtol=1e-5), "f32 mismatch"

    # --- larger batch: exercises multi-step grid (2 tiles of 256 rows) ----
    B2 = 512
    x2 = jax.random.normal(k_x2, (B2, input_size), jnp.float32)
    out2 = jax.block_until_ready(mlp_forward(x2, *params))
    ref2 = _reference(x2, params)
    assert out2.shape == (B2, out_size)
    assert jnp.allclose(out2, ref2, atol=1e-5, rtol=1e-5), "tiled f32 mismatch"

    # --- bf16 MXU inputs (f32 accumulate + f32 elementwise) ---------------
    out_bf16 = jax.block_until_ready(
        mlp_forward(x2, *params, compute_dtype=jnp.bfloat16))
    assert jnp.allclose(out_bf16, ref2, atol=2e-2, rtol=2e-2), "bf16 mismatch"

    print("KERNEL_OK")
</pallas_src>

<mosaic_0001>
module attributes {stable_mosaic.version = 11 : i64} {
  func.func @_mlp_kernel(%arg0: i32, %arg1: memref<8x128xf32, #tpu.memory_space<vmem>>, %arg2: memref<128x128xf32, #tpu.memory_space<vmem>>, %arg3: memref<1x128xf32, #tpu.memory_space<vmem>>, %arg4: memref<128x128xf32, #tpu.memory_space<vmem>>, %arg5: memref<1x128xf32, #tpu.memory_space<vmem>>, %arg6: memref<128x128xf32, #tpu.memory_space<vmem>>, %arg7: memref<1x128xf32, #tpu.memory_space<vmem>>, %arg8: memref<8x128xf32, #tpu.memory_space<vmem>>) attributes {dimension_semantics = [#tpu.dimension_semantics<parallel>], iteration_bounds = array<i64: 1>, scalar_prefetch = 0 : i64, scratch_operands = 0 : i64, tpu.core_type = #tpu.core_type<tc>, window_params = [{transform_indices = @transform_0, window_bounds = array<i64: 8, 128>}, {pipeline_mode = #tpu.pipeline_mode<synchronous>, transform_indices = @transform_1, window_bounds = array<i64: 128, 128>}, {pipeline_mode = #tpu.pipeline_mode<synchronous>, transform_indices = @transform_2, window_bounds = array<i64: 1, 128>}, {pipeline_mode = #tpu.pipeline_mode<synchronous>, transform_indices = @transform_3, window_bounds = array<i64: 128, 128>}, {pipeline_mode = #tpu.pipeline_mode<synchronous>, transform_indices = @transform_4, window_bounds = array<i64: 1, 128>}, {pipeline_mode = #tpu.pipeline_mode<synchronous>, transform_indices = @transform_5, window_bounds = array<i64: 128, 128>}, {pipeline_mode = #tpu.pipeline_mode<synchronous>, transform_indices = @transform_6, window_bounds = array<i64: 1, 128>}, {transform_indices = @transform_7, window_bounds = array<i64: 8, 128>}]} {
    %c0 = arith.constant 0 : index
    %c0_0 = arith.constant 0 : index
    %0 = vector.load %arg1[%c0, %c0_0] : memref<8x128xf32, #tpu.memory_space<vmem>>, vector<8x128xf32>
    %c0_1 = arith.constant 0 : index
    %c0_2 = arith.constant 0 : index
    %1 = vector.load %arg2[%c0_1, %c0_2] : memref<128x128xf32, #tpu.memory_space<vmem>>, vector<128x128xf32>
    %cst = arith.constant dense<0.000000e+00> : vector<8x128xf32>
    %2 = tpu.matmul %0, %1, %cst {dimension_numbers = #tpu.dot_dimension_numbers<[1], [0], [0], [1], [0, 0, 1, 1], [], []>} : vector<8x128xf32>, vector<128x128xf32>, vector<8x128xf32> -> vector<8x128xf32>
    %c0_3 = arith.constant 0 : index
    %c0_4 = arith.constant 0 : index
    %3 = vector.load %arg3[%c0_3, %c0_4] : memref<1x128xf32, #tpu.memory_space<vmem>>, vector<1x128xf32>
    %4 = vector.broadcast %3 : vector<1x128xf32> to vector<8x128xf32>
    %5 = arith.addf %2, %4 : vector<8x128xf32>
    %6 = arith.negf %5 : vector<8x128xf32>
    %7 = math.exp %6 : vector<8x128xf32>
    %cst_5 = arith.constant 1.000000e+00 : f32
    %8 = vector.broadcast %cst_5 : f32 to vector<8x128xf32>
    %9 = arith.addf %8, %7 : vector<8x128xf32>
    %10 = arith.divf %8, %9 : vector<8x128xf32>
    %c0_6 = arith.constant 0 : index
    %c0_7 = arith.constant 0 : index
    %11 = vector.load %arg4[%c0_6, %c0_7] : memref<128x128xf32, #tpu.memory_space<vmem>>, vector<128x128xf32>
    %cst_8 = arith.constant dense<0.000000e+00> : vector<8x128xf32>
    %12 = tpu.matmul %10, %11, %cst_8 {dimension_numbers = #tpu.dot_dimension_numbers<[1], [0], [0], [1], [0, 0, 1, 1], [], []>} : vector<8x128xf32>, vector<128x128xf32>, vector<8x128xf32> -> vector<8x128xf32>
    %c0_9 = arith.constant 0 : index
    %c0_10 = arith.constant 0 : index
    %13 = vector.load %arg5[%c0_9, %c0_10] : memref<1x128xf32, #tpu.memory_space<vmem>>, vector<1x128xf32>
    %14 = vector.broadcast %13 : vector<1x128xf32> to vector<8x128xf32>
    %15 = arith.addf %12, %14 : vector<8x128xf32>
    %16 = arith.negf %15 : vector<8x128xf32>
    %17 = math.exp %16 : vector<8x128xf32>
    %cst_11 = arith.constant 1.000000e+00 : f32
    %18 = vector.broadcast %cst_11 : f32 to vector<8x128xf32>
    %19 = arith.addf %18, %17 : vector<8x128xf32>
    %20 = arith.divf %18, %19 : vector<8x128xf32>
    %c0_12 = arith.constant 0 : index
    %c0_13 = arith.constant 0 : index
    %21 = vector.load %arg6[%c0_12, %c0_13] : memref<128x128xf32, #tpu.memory_space<vmem>>, vector<128x128xf32>
    %cst_14 = arith.constant dense<0.000000e+00> : vector<8x128xf32>
    %22 = tpu.matmul %20, %21, %cst_14 {dimension_numbers = #tpu.dot_dimension_numbers<[1], [0], [0], [1], [0, 0, 1, 1], [], []>} : vector<8x128xf32>, vector<128x128xf32>, vector<8x128xf32> -> vector<8x128xf32>
    %c0_15 = arith.constant 0 : index
    %c0_16 = arith.constant 0 : index
    %23 = vector.load %arg7[%c0_15, %c0_16] : memref<1x128xf32, #tpu.memory_space<vmem>>, vector<1x128xf32>
    %24 = vector.broadcast %23 : vector<1x128xf32> to vector<8x128xf32>
    %25 = arith.addf %22, %24 : vector<8x128xf32>
    %26 = arith.negf %25 : vector<8x128xf32>
    %27 = math.exp %26 : vector<8x128xf32>
    %cst_17 = arith.constant 1.000000e+00 : f32
    %28 = vector.broadcast %cst_17 : f32 to vector<8x128xf32>
    %29 = arith.addf %28, %27 : vector<8x128xf32>
    %30 = arith.divf %28, %29 : vector<8x128xf32>
    %c0_18 = arith.constant 0 : index
    %c0_19 = arith.constant 0 : index
    %31 = vector.load %arg8[%c0_18, %c0_19] : memref<8x128xf32, #tpu.memory_space<vmem>>, vector<8x128xf32>
    tpu.vector_store %arg8[%c0_18, %c0_19], %30 {strides = array<i32>} : memref<8x128xf32, #tpu.memory_space<vmem>>, vector<8x128xf32>,
    return
  }
  func.func @transform_0(%arg0: i32) -> (i32, i32) {
    %c0_i32 = arith.constant 0 : i32
    %c0_i32_0 = arith.constant 0 : i32
    return %arg0, %c0_i32 : i32, i32
  }
  func.func @transform_1(%arg0: i32) -> (i32, i32) {
    %c0_i32 = arith.constant 0 : i32
    %c0_i32_0 = arith.constant 0 : i32
    %c0_i32_1 = arith.constant 0 : i32
    return %c0_i32, %c0_i32_0 : i32, i32
  }
  func.func @transform_2(%arg0: i32) -> (i32, i32) {
    %c0_i32 = arith.constant 0 : i32
    %c0_i32_0 = arith.constant 0 : i32
    %c0_i32_1 = arith.constant 0 : i32
    return %c0_i32, %c0_i32_0 : i32, i32
  }
  func.func @transform_3(%arg0: i32) -> (i32, i32) {
    %c0_i32 = arith.constant 0 : i32
    %c0_i32_0 = arith.constant 0 : i32
    %c0_i32_1 = arith.constant 0 : i32
    return %c0_i32, %c0_i32_0 : i32, i32
  }
  func.func @transform_4(%arg0: i32) -> (i32, i32) {
    %c0_i32 = arith.constant 0 : i32
    %c0_i32_0 = arith.constant 0 : i32
    %c0_i32_1 = arith.constant 0 : i32
    return %c0_i32, %c0_i32_0 : i32, i32
  }
  func.func @transform_5(%arg0: i32) -> (i32, i32) {
    %c0_i32 = arith.constant 0 : i32
    %c0_i32_0 = arith.constant 0 : i32
    %c0_i32_1 = arith.constant 0 : i32
    return %c0_i32, %c0_i32_0 : i32, i32
  }
  func.func @transform_6(%arg0: i32) -> (i32, i32) {
    %c0_i32 = arith.constant 0 : i32
    %c0_i32_0 = arith.constant 0 : i32
    %c0_i32_1 = arith.constant 0 : i32
    return %c0_i32, %c0_i32_0 : i32, i32
  }
  func.func @transform_7(%arg0: i32) -> (i32, i32) {
    %c0_i32 = arith.constant 0 : i32
    %c0_i32_0 = arith.constant 0 : i32
    return %arg0, %c0_i32 : i32, i32
  }
}

</mosaic_0001>

<llo_original>
// kernel: mlp_forward.1
$region0: #{mlp_forward.1}
  #allocation0 [shape = 'u32[]', space=smem, size = 0x4, offset = 0x4, fixed_abs, tag = 'smem constant byte address 0x4 - core index']
  #allocation1 [shape = 'u32[144,128]{1,0:T(1,128)}', space=vmem, size = 0x12000, scoped, tag = 'internal scratch']
  %s0 = inlined_call_operand.vmem [shape: f32[8,128], index: 0, kind: input, shape index: {}]
  %s1 = inlined_call_operand.vmem [shape: f32[128,128], index: 1, kind: input, shape index: {}]
  %s2 = inlined_call_operand.vmem [shape: f32[1,128], index: 2, kind: input, shape index: {}]
  %s3 = inlined_call_operand.vmem [shape: f32[128,128], index: 3, kind: input, shape index: {}]
  %s4 = inlined_call_operand.vmem [shape: f32[1,128], index: 4, kind: input, shape index: {}]
  %s5 = inlined_call_operand.vmem [shape: f32[128,128], index: 5, kind: input, shape index: {}]
  %s6 = inlined_call_operand.vmem [shape: f32[1,128], index: 6, kind: input, shape index: {}]
  %s7 = inlined_call_operand.vmem [shape: f32[8,128], index: 7, kind: output, shape index: {}]
  %s8 = sld [smem:[#allocation0]]
  $region38: #{mlp_forward.1} parent=0
    _
  %s10 = ssub.s32 1, %s8
  %s11 = scalar_select 0, %s10, %s8
  // Predicated region
  $region2: #{mlp_forward.1} parent=0 // pred_check
    _
  $region3: #{mlp_forward.1} parent=0 // pred_check_branch
    %13 = sbr.rel (0) target = $region5
  $region4: #{mlp_forward.1} parent=0 // pred_region
    _
  $region5: #{mlp_forward.1} parent=0 // pred_fallthru
    _
  // Predicated region
  $region6: #{mlp_forward.1} parent=0 // pred_check
    _
  $region7: #{mlp_forward.1} parent=0 // pred_check_branch
    %15 = sbr.rel (0) target = $region9
  $region8: #{mlp_forward.1} parent=0 // pred_region
    _
  $region9: #{mlp_forward.1} parent=0 // pred_fallthru
    _
  // Predicated region
  $region10: #{mlp_forward.1} parent=0 // pred_check
    _
  $region11: #{mlp_forward.1} parent=0 // pred_check_branch
    %17 = sbr.rel (0) target = $region13
  $region12: #{mlp_forward.1} parent=0 // pred_region
    _
  $region13: #{mlp_forward.1} parent=0 // pred_fallthru
    _
  // Predicated region
  $region14: #{mlp_forward.1} parent=0 // pred_check
    _
  $region15: #{mlp_forward.1} parent=0 // pred_check_branch
    %19 = sbr.rel (0) target = $region17
  $region16: #{mlp_forward.1} parent=0 // pred_region
    _
  $region17: #{mlp_forward.1} parent=0 // pred_fallthru
    _
  // Predicated region
  $region18: #{mlp_forward.1} parent=0 // pred_check
    _
  $region19: #{mlp_forward.1} parent=0 // pred_check_branch
    %21 = sbr.rel (0) target = $region21
  $region20: #{mlp_forward.1} parent=0 // pred_region
    _
  $region21: #{mlp_forward.1} parent=0 // pred_fallthru
    _
  // Predicated region
  $region22: #{mlp_forward.1} parent=0 // pred_check
    _
  $region23: #{mlp_forward.1} parent=0 // pred_check_branch
    %23 = sbr.rel (0) target = $region25
  $region24: #{mlp_forward.1} parent=0 // pred_region
    _
  $region25: #{mlp_forward.1} parent=0 // pred_fallthru
    _
  // Predicated region
  $region26: #{mlp_forward.1} parent=0 // pred_check
    _
  $region27: #{mlp_forward.1} parent=0 // pred_check_branch
    %25 = sbr.rel (0) target = $region29
  $region28: #{mlp_forward.1} parent=0 // pred_region
    _
  $region29: #{mlp_forward.1} parent=0 // pred_fallthru
    _
  %v26 = vld [vmem:[%s0] sm:$0xff]
  %v27 = vld [vmem:[%s1] sm:$0xff]
  %v28 = vld [vmem:[%s1 + $0x8] sm:$0xff]
  %v29 = vld [vmem:[%s1 + $0x10] sm:$0xff]
  %v30 = vld [vmem:[%s1 + $0x18] sm:$0xff]
  %v31 = vld [vmem:[%s1 + $0x20] sm:$0xff]
  %v32 = vld [vmem:[%s1 + $0x28] sm:$0xff]
  %v33 = vld [vmem:[%s1 + $0x30] sm:$0xff]
  %v34 = vld [vmem:[%s1 + $0x38] sm:$0xff]
  %v35 = vld [vmem:[%s1 + $0x40] sm:$0xff]
  %v36 = vld [vmem:[%s1 + $0x48] sm:$0xff]
  %v37 = vld [vmem:[%s1 + $0x50] sm:$0xff]
  %v38 = vld [vmem:[%s1 + $0x58] sm:$0xff]
  %v39 = vld [vmem:[%s1 + $0x60] sm:$0xff]
  %v40 = vld [vmem:[%s1 + $0x68] sm:$0xff]
  %v41 = vld [vmem:[%s1 + $0x70] sm:$0xff]
  %v42 = vld [vmem:[%s1 + $0x78] sm:$0xff]
  %v43 = vld [vmem:[%s2] sm:$0x1]
  %v45 = vlaneseq
  %v46 = vshrl.u32 %v45, 7
  %v47 = vsub.s32 0, %v46
  %v48 = vrot.slane %v43, %v47
  %50 = vmatprep.subr.mxu0 0.0
  %51 = vmatpush1.msra.mxu0 %v27
  %52 = vmatprep.subr.mxu0 0.0
  %53 = vmatpush1.msra.mxu0 %v28
  %54 = vmatprep.subr.mxu0 0.0
  %55 = vmatpush1.msra.mxu0 %v29
  %56 = vmatprep.subr.mxu0 0.0
  %57 = vmatpush1.msra.mxu0 %v30
  %58 = vmatprep.subr.mxu0 0.0
  %59 = vmatpush1.msra.mxu0 %v31
  %60 = vmatprep.subr.mxu0 0.0
  %61 = vmatpush1.msra.mxu0 %v32
  %62 = vmatprep.subr.mxu0 0.0
  %63 = vmatpush1.msra.mxu0 %v33
  %64 = vmatprep.subr.mxu0 0.0
  %65 = vmatpush1.msra.mxu0 %v34
  %66 = vmatprep.subr.mxu0 0.0
  %67 = vmatpush1.msra.mxu0 %v35
  %68 = vmatprep.subr.mxu0 0.0
  %69 = vmatpush1.msra.mxu0 %v36
  %70 = vmatprep.subr.mxu0 0.0
  %71 = vmatpush1.msra.mxu0 %v37
  %72 = vmatprep.subr.mxu0 0.0
  %73 = vmatpush1.msra.mxu0 %v38
  %74 = vmatprep.subr.mxu0 0.0
  %75 = vmatpush1.msra.mxu0 %v39
  %76 = vmatprep.subr.mxu0 0.0
  %77 = vmatpush1.msra.mxu0 %v40
  %78 = vmatprep.subr.mxu0 0.0
  %79 = vmatpush1.msra.mxu0 %v41
  %80 = vmatprep.subr.mxu0 0.0
  %81 = vmatpush1.msra.mxu0 %v42
  %82 = vmatprep.subr.mxu0 0.0
  %83 = vmatpush1.msra.mxu0 0.0
  %84 = vmatprep.subr.mxu0 0.0
  %85 = vmatpush1.msra.mxu0 0.0
  %86 = vmatprep.subr.mxu0 0.0
  %87 = vmatpush1.msra.mxu0 0.0
  %88 = vmatprep.subr.mxu0 0.0
  %89 = vmatpush1.msra.mxu0 0.0
  %90 = vmatprep.subr.mxu0 0.0
  %91 = vmatpush1.msra.mxu0 0.0
  %92 = vmatprep.subr.mxu0 0.0
  %93 = vmatpush1.msra.mxu0 0.0
  %94 = vmatprep.subr.mxu0 0.0
  %95 = vmatpush1.msra.mxu0 0.0
  %96 = vmatprep.subr.mxu0 0.0
  %97 = vmatpush1.msra.mxu0 0.0
  %98 = vmatprep.subr.mxu0 0.0
  %99 = vmatpush1.msra.mxu0 0.0
  %100 = vmatprep.subr.mxu0 0.0
  %101 = vmatpush1.msra.mxu0 0.0
  %102 = vmatprep.subr.mxu0 0.0
  %103 = vmatpush1.msra.mxu0 0.0
  %104 = vmatprep.subr.mxu0 0.0
  %105 = vmatpush1.msra.mxu0 0.0
  %106 = vmatprep.subr.mxu0 0.0
  %107 = vmatpush1.msra.mxu0 0.0
  %108 = vmatprep.subr.mxu0 0.0
  %109 = vmatpush1.msra.mxu0 0.0
  %110 = vmatprep.subr.mxu0 0.0
  %111 = vmatpush1.msra.mxu0 0.0
  %112 = vmatprep.subr.mxu0 0.0
  %113 = vmatpush1.msra.mxu0 0.0
  %114 = vmatprep.mubr.f32.mxu0 0.0
  %115 = vmatmul.mubr.f32.gmra.mrb[0].mxu0 %v26
  %v116 = vpop.f32.mrb[0].mxu0
  %v117 = vadd.f32 %v48, %v116
  %v118 = vpop.f32.mrb[0].mxu0
  %119 = vdwg.mxu0
  %v120 = vxor.u32 %v117, 2147483648
  %v121 = vmul.f32 %v120, 1.442695
  %v122 = vpow.pop %v121
  %v123 = vadd.f32 %v122, 1.0
  %v124 = vrcp.pop %v123
  %v125 = vmul.f32 1.0, %v124
  %v126 = vld [vmem:[%s3] sm:$0xff]
  %v127 = vld [vmem:[%s3 + $0x8] sm:$0xff]
  %v128 = vld [vmem:[%s3 + $0x10] sm:$0xff]
  %v129 = vld [vmem:[%s3 + $0x18] sm:$0xff]
  %v130 = vld [vmem:[%s3 + $0x20] sm:$0xff]
  %v131 = vld [vmem:[%s3 + $0x28] sm:$0xff]
  %v132 = vld [vmem:[%s3 + $0x30] sm:$0xff]
  %v133 = vld [vmem:[%s3 + $0x38] sm:$0xff]
  %v134 = vld [vmem:[%s3 + $0x40] sm:$0xff]
  %v135 = vld [vmem:[%s3 + $0x48] sm:$0xff]
  %v136 = vld [vmem:[%s3 + $0x50] sm:$0xff]
  %v137 = vld [vmem:[%s3 + $0x58] sm:$0xff]
  %v138 = vld [vmem:[%s3 + $0x60] sm:$0xff]
  %v139 = vld [vmem:[%s3 + $0x68] sm:$0xff]
  %v140 = vld [vmem:[%s3 + $0x70] sm:$0xff]
  %v141 = vld [vmem:[%s3 + $0x78] sm:$0xff]
  %v142 = vld [vmem:[%s4] sm:$0x1]
  %v144 = vlaneseq
  %v145 = vshrl.u32 %v144, 7
  %v146 = vsub.s32 0, %v145
  %v147 = vrot.slane %v142, %v146
  %149 = vmatprep.subr.mxu0 0.0
  %150 = vmatpush1.msra.mxu0 %v126
  %151 = vmatprep.subr.mxu0 0.0
  %152 = vmatpush1.msra.mxu0 %v127
  %153 = vmatprep.subr.mxu0 0.0
  %154 = vmatpush1.msra.mxu0 %v128
  %155 = vmatprep.subr.mxu0 0.0
  %156 = vmatpush1.msra.mxu0 %v129
  %157 = vmatprep.subr.mxu0 0.0
  %158 = vmatpush1.msra.mxu0 %v130
  %159 = vmatprep.subr.mxu0 0.0
  %160 = vmatpush1.msra.mxu0 %v131
  %161 = vmatprep.subr.mxu0 0.0
  %162 = vmatpush1.msra.mxu0 %v132
  %163 = vmatprep.subr.mxu0 0.0
  %164 = vmatpush1.msra.mxu0 %v133
  %165 = vmatprep.subr.mxu0 0.0
  %166 = vmatpush1.msra.mxu0 %v134
  %167 = vmatprep.subr.mxu0 0.0
  %168 = vmatpush1.msra.mxu0 %v135
  %169 = vmatprep.subr.mxu0 0.0
  %170 = vmatpush1.msra.mxu0 %v136
  %171 = vmatprep.subr.mxu0 0.0
  %172 = vmatpush1.msra.mxu0 %v137
  %173 = vmatprep.subr.mxu0 0.0
  %174 = vmatpush1.msra.mxu0 %v138
  %175 = vmatprep.subr.mxu0 0.0
  %176 = vmatpush1.msra.mxu0 %v139
  %177 = vmatprep.subr.mxu0 0.0
  %178 = vmatpush1.msra.mxu0 %v140
  %179 = vmatprep.subr.mxu0 0.0
  %180 = vmatpush1.msra.mxu0 %v141
  %181 = vmatprep.subr.mxu0 0.0
  %182 = vmatpush1.msra.mxu0 0.0
  %183 = vmatprep.subr.mxu0 0.0
  %184 = vmatpush1.msra.mxu0 0.0
  %185 = vmatprep.subr.mxu0 0.0
  %186 = vmatpush1.msra.mxu0 0.0
  %187 = vmatprep.subr.mxu0 0.0
  %188 = vmatpush1.msra.mxu0 0.0
  %189 = vmatprep.subr.mxu0 0.0
  %190 = vmatpush1.msra.mxu0 0.0
  %191 = vmatprep.subr.mxu0 0.0
  %192 = vmatpush1.msra.mxu0 0.0
  %193 = vmatprep.subr.mxu0 0.0
  %194 = vmatpush1.msra.mxu0 0.0
  %195 = vmatprep.subr.mxu0 0.0
  %196 = vmatpush1.msra.mxu0 0.0
  %197 = vmatprep.subr.mxu0 0.0
  %198 = vmatpush1.msra.mxu0 0.0
  %199 = vmatprep.subr.mxu0 0.0
  %200 = vmatpush1.msra.mxu0 0.0
  %201 = vmatprep.subr.mxu0 0.0
  %202 = vmatpush1.msra.mxu0 0.0
  %203 = vmatprep.subr.mxu0 0.0
  %204 = vmatpush1.msra.mxu0 0.0
  %205 = vmatprep.subr.mxu0 0.0
  %206 = vmatpush1.msra.mxu0 0.0
  %207 = vmatprep.subr.mxu0 0.0
  %208 = vmatpush1.msra.mxu0 0.0
  %209 = vmatprep.subr.mxu0 0.0
  %210 = vmatpush1.msra.mxu0 0.0
  %211 = vmatprep.subr.mxu0 0.0
  %212 = vmatpush1.msra.mxu0 0.0
  %213 = vmatprep.mubr.f32.mxu0 0.0
  %214 = vmatmul.mubr.f32.gmra.mrb[0].mxu0 %v125
  %v215 = vpop.f32.mrb[0].mxu0
  %v216 = vadd.f32 %v147, %v215
  %v217 = vpop.f32.mrb[0].mxu0
  %218 = vdwg.mxu0
  %v219 = vxor.u32 %v216, 2147483648
  %v220 = vmul.f32 %v219, 1.442695
  %v221 = vpow.pop %v220
  %v222 = vadd.f32 %v221, 1.0
  %v223 = vrcp.pop %v222
  %v224 = vmul.f32 1.0, %v223
  %v225 = vld [vmem:[%s5] sm:$0xff]
  %v226 = vld [vmem:[%s5 + $0x8] sm:$0xff]
  %v227 = vld [vmem:[%s5 + $0x10] sm:$0xff]
  %v228 = vld [vmem:[%s5 + $0x18] sm:$0xff]
  %v229 = vld [vmem:[%s5 + $0x20] sm:$0xff]
  %v230 = vld [vmem:[%s5 + $0x28] sm:$0xff]
  %v231 = vld [vmem:[%s5 + $0x30] sm:$0xff]
  %v232 = vld [vmem:[%s5 + $0x38] sm:$0xff]
  %v233 = vld [vmem:[%s5 + $0x40] sm:$0xff]
  %v234 = vld [vmem:[%s5 + $0x48] sm:$0xff]
  %v235 = vld [vmem:[%s5 + $0x50] sm:$0xff]
  %v236 = vld [vmem:[%s5 + $0x58] sm:$0xff]
  %v237 = vld [vmem:[%s5 + $0x60] sm:$0xff]
  %v238 = vld [vmem:[%s5 + $0x68] sm:$0xff]
  %v239 = vld [vmem:[%s5 + $0x70] sm:$0xff]
  %v240 = vld [vmem:[%s5 + $0x78] sm:$0xff]
  %v241 = vld [vmem:[%s6] sm:$0x1]
  %v243 = vlaneseq
  %v244 = vshrl.u32 %v243, 7
  %v245 = vsub.s32 0, %v244
  %v246 = vrot.slane %v241, %v245
  %248 = vmatprep.subr.mxu0 0.0
  %249 = vmatpush1.msra.mxu0 %v225
  %250 = vmatprep.subr.mxu0 0.0
  %251 = vmatpush1.msra.mxu0 %v226
  %252 = vmatprep.subr.mxu0 0.0
  %253 = vmatpush1.msra.mxu0 %v227
  %254 = vmatprep.subr.mxu0 0.0
  %255 = vmatpush1.msra.mxu0 %v228
  %256 = vmatprep.subr.mxu0 0.0
  %257 = vmatpush1.msra.mxu0 %v229
  %258 = vmatprep.subr.mxu0 0.0
  %259 = vmatpush1.msra.mxu0 %v230
  %260 = vmatprep.subr.mxu0 0.0
  %261 = vmatpush1.msra.mxu0 %v231
  %262 = vmatprep.subr.mxu0 0.0
  %263 = vmatpush1.msra.mxu0 %v232
  %264 = vmatprep.subr.mxu0 0.0
  %265 = vmatpush1.msra.mxu0 %v233
  %266 = vmatprep.subr.mxu0 0.0
  %267 = vmatpush1.msra.mxu0 %v234
  %268 = vmatprep.subr.mxu0 0.0
  %269 = vmatpush1.msra.mxu0 %v235
  %270 = vmatprep.subr.mxu0 0.0
  %271 = vmatpush1.msra.mxu0 %v236
  %272 = vmatprep.subr.mxu0 0.0
  %273 = vmatpush1.msra.mxu0 %v237
  %274 = vmatprep.subr.mxu0 0.0
  %275 = vmatpush1.msra.mxu0 %v238
  %276 = vmatprep.subr.mxu0 0.0
  %277 = vmatpush1.msra.mxu0 %v239
  %278 = vmatprep.subr.mxu0 0.0
  %279 = vmatpush1.msra.mxu0 %v240
  %280 = vmatprep.subr.mxu0 0.0
  %281 = vmatpush1.msra.mxu0 0.0
  %282 = vmatprep.subr.mxu0 0.0
  %283 = vmatpush1.msra.mxu0 0.0
  %284 = vmatprep.subr.mxu0 0.0
  %285 = vmatpush1.msra.mxu0 0.0
  %286 = vmatprep.subr.mxu0 0.0
  %287 = vmatpush1.msra.mxu0 0.0
  %288 = vmatprep.subr.mxu0 0.0
  %289 = vmatpush1.msra.mxu0 0.0
  %290 = vmatprep.subr.mxu0 0.0
  %291 = vmatpush1.msra.mxu0 0.0
  %292 = vmatprep.subr.mxu0 0.0
  %293 = vmatpush1.msra.mxu0 0.0
  %294 = vmatprep.subr.mxu0 0.0
  %295 = vmatpush1.msra.mxu0 0.0
  %296 = vmatprep.subr.mxu0 0.0
  %297 = vmatpush1.msra.mxu0 0.0
  %298 = vmatprep.subr.mxu0 0.0
  %299 = vmatpush1.msra.mxu0 0.0
  %300 = vmatprep.subr.mxu0 0.0
  %301 = vmatpush1.msra.mxu0 0.0
  %302 = vmatprep.subr.mxu0 0.0
  %303 = vmatpush1.msra.mxu0 0.0
  %304 = vmatprep.subr.mxu0 0.0
  %305 = vmatpush1.msra.mxu0 0.0
  %306 = vmatprep.subr.mxu0 0.0
  %307 = vmatpush1.msra.mxu0 0.0
  %308 = vmatprep.subr.mxu0 0.0
  %309 = vmatpush1.msra.mxu0 0.0
  %310 = vmatprep.subr.mxu0 0.0
  %311 = vmatpush1.msra.mxu0 0.0
  %312 = vmatprep.mubr.f32.mxu0 0.0
  %313 = vmatmul.mubr.f32.gmra.mrb[0].mxu0 %v224
  %v314 = vpop.f32.mrb[0].mxu0
  %v315 = vadd.f32 %v246, %v314
  %v316 = vpop.f32.mrb[0].mxu0
  %317 = vdwg.mxu0
  %v318 = vxor.u32 %v315, 2147483648
  %v319 = vmul.f32 %v318, 1.442695
  %v320 = vpow.pop %v319
  %v321 = vadd.f32 %v320, 1.0
  %v322 = vrcp.pop %v321
  %v323 = vmul.f32 1.0, %v322
  %324 = vst [vmem:[%s7] sm:$0xff] %v323
  // Predicated region
  $region30: #{mlp_forward.1} parent=0 // pred_check
    _
  $region31: #{mlp_forward.1} parent=0 // pred_check_branch
    %326 = sbr.rel (0) target = $region33
  $region32: #{mlp_forward.1} parent=0 // pred_region
    _
  $region33: #{mlp_forward.1} parent=0 // pred_fallthru
    _
  // Predicated region
  $region34: #{mlp_forward.1} parent=0 // pred_check
    _
  $region35: #{mlp_forward.1} parent=0 // pred_check_branch
    %328 = sbr.rel (0) target = $region37
  $region36: #{mlp_forward.1} parent=0 // pred_region
    _
  $region37: #{mlp_forward.1} parent=0 // pred_fallthru
    _

</llo_original>
